<compile_context>
chip_gen: v6e
topology: v6e:2x2x1
jax: 0.10.0
libtpu: 0.0.40
codegen_flags: <defaults>
</compile_context>

<pallas_src>
import functools

import jax
import jax.numpy as jnp
from jax.experimental import pallas as pl
from jax.experimental.pallas import tpu as pltpu


def _vision_encoder_kernel(x_ref, w_ref, b_ref, gamma_ref, beta_ref, out_ref,
                           *, eps):
    # x block: (row_tile, F).  Cast activations to the weight dtype (bf16 by
    # default) so the MXU runs its fast path; accumulate in f32.
    x = x_ref[...].astype(w_ref.dtype)
    y = jnp.dot(x, w_ref[...], preferred_element_type=jnp.float32)
    y = y + b_ref[...].astype(jnp.float32)                       # (rt, H) f32

    # visn_layer_norm over the hidden dim (eps = 1e-12, BertLayerNorm),
    # numerically-stable two-pass form, all in f32.
    mu = jnp.mean(y, axis=-1, keepdims=True)
    yc = y - mu
    var = jnp.mean(yc * yc, axis=-1, keepdims=True)
    inv = jax.lax.rsqrt(var + eps)
    out_ref[...] = (yc * inv * gamma_ref[...].astype(jnp.float32)
                    + beta_ref[...].astype(jnp.float32)).astype(out_ref.dtype)
    # dropout: identity in eval mode (see TODO above).


def _round_up(n, m):
    return ((n + m - 1) // m) * m


def _resident_weight_spec(shape, index_map):
    """Constant-index (VMEM-resident) weight spec; single-buffered if supported."""
    buffered = getattr(pl, "Buffered", None)
    if buffered is not None:
        try:
            return pl.BlockSpec(shape, index_map, pipeline_mode=buffered(1)), 1
        except TypeError:
            pass
    return pl.BlockSpec(shape, index_map), 2


def vision_encoder(visn_input, params, *, eps=1e-12, row_tile=256,
                   matmul_dtype=jnp.bfloat16, out_dtype=None):
    """visn_input: [B, S, F].  params: w [F, H], b/gamma/beta [1, H]."""
    B, S, F = visn_input.shape
    H = params['w'].shape[1]
    out_dtype = out_dtype or visn_input.dtype

    # Flatten (B, S) into one row axis: full-size tiles regardless of S.
    rows = B * S
    x2d = visn_input.reshape(rows, F)

    # Row tile: fixed 256 (fills the 256x256 MXU M-dim on v6e/v7x, fits VMEM on
    # all generations); clamp to a sublane-aligned size for tiny inputs.
    # Non-divisible row counts are handled by pl.cdiv + Pallas tail masking.
    rt = min(row_tile, _round_up(rows, 8))
    n_tiles = pl.cdiv(rows, rt)

    # Parameters: weight lives in HBM/VMEM as bf16 (halves its DMA + residency),
    # bias / LN params stay f32.
    w = params['w'].astype(matmul_dtype)
    b = params['b'].astype(jnp.float32)
    gamma = params['gamma'].astype(jnp.float32)
    beta = params['beta'].astype(jnp.float32)

    kernel = functools.partial(_vision_encoder_kernel, eps=eps)

    w_spec, w_bufs = _resident_weight_spec((F, H), lambda r: (0, 0))
    const_small = lambda: pl.BlockSpec((1, H), lambda r: (0, 0))

    # Explicit VMEM budget from the actual block footprint (double-buffered
    # activations in/out, weight buffer count as configured, small params).
    itemsize = lambda dt: jnp.dtype(dt).itemsize
    footprint = (2 * rt * F * itemsize(x2d.dtype)
                 + 2 * rt * H * itemsize(out_dtype)
                 + w_bufs * F * H * itemsize(matmul_dtype)
                 + 3 * 2 * H * 4)
    vmem_limit = int(1.5 * footprint) + (2 << 20)
    vmem_limit = max(8 << 20, min(64 << 20, vmem_limit))

    cost = pl.CostEstimate(
        flops=2 * rows * F * H,
        transcendentals=0,
        bytes_accessed=(rows * F * itemsize(x2d.dtype)
                        + F * H * itemsize(matmul_dtype)
                        + 3 * H * 4
                        + rows * H * itemsize(out_dtype)),
    )

    out2d = pl.pallas_call(
        kernel,
        out_shape=jax.ShapeDtypeStruct((rows, H), out_dtype),
        grid_spec=pltpu.PrefetchScalarGridSpec(
            num_scalar_prefetch=0,
            grid=(n_tiles,),
            in_specs=[
                pl.BlockSpec((rt, F), lambda r: (r, 0)),   # activations
                w_spec,                                    # visn_fc weight [F, H]
                const_small(),                             # visn_fc bias
                const_small(),                             # LayerNorm gamma
                const_small(),                             # LayerNorm beta
            ],
            out_specs=pl.BlockSpec((rt, H), lambda r: (r, 0)),
        ),
        compiler_params=pltpu.CompilerParams(
            dimension_semantics=("parallel",),
            vmem_limit_bytes=vmem_limit),
        cost_estimate=cost,
    )(x2d, w, b, gamma, beta)

    return out2d.reshape(B, S, H)


def _reference(visn_input, params, eps=1e-12, matmul_dtype=jnp.float32):
    x = visn_input.astype(matmul_dtype)
    w = params['w'].astype(matmul_dtype)
    y = jnp.einsum('bsf,fh->bsh', x, w,
                   preferred_element_type=jnp.float32) + params['b'][0]
    mu = jnp.mean(y, axis=-1, keepdims=True)
    var = jnp.mean((y - mu) ** 2, axis=-1, keepdims=True)
    y = (y - mu) / jnp.sqrt(var + eps)
    return y * params['gamma'][0] + params['beta'][0]


if __name__ == "__main__":
    # small config: batch=2, seq=8, vision_size=48, hidden=32
    B, S, F, H = 2, 8, 48, 32

    key = jax.random.PRNGKey(0)
    ks = jax.random.split(key, 5)

    visn_input = jax.random.normal(ks[0], (B, S, F), dtype=jnp.float32)
    params = {
        # torch Linear weight is [H, F]; stored pre-transposed as [F, H] here.
        'w': 0.02 * jax.random.normal(ks[1], (F, H), dtype=jnp.float32),
        'b': 0.02 * jax.random.normal(ks[2], (1, H), dtype=jnp.float32),
        'gamma': 1.0 + 0.1 * jax.random.normal(ks[3], (1, H), dtype=jnp.float32),
        'beta': 0.1 * jax.random.normal(ks[4], (1, H), dtype=jnp.float32),
    }

    out = vision_encoder(visn_input, params)
    jax.block_until_ready(out)

    # Check against a reference using the same bf16 GEMM operands (tight), and
    # against the pure-f32 reference (loose, bf16 rounding of the projection).
    ref_bf16 = _reference(visn_input, params, matmul_dtype=jnp.bfloat16)
    ref_f32 = _reference(visn_input, params, matmul_dtype=jnp.float32)
    assert jnp.allclose(out, ref_bf16, atol=2e-3, rtol=2e-3), \
        "VisionEncoder mismatch vs bf16-matched reference"
    assert jnp.allclose(out, ref_f32, atol=5e-2, rtol=5e-2), \
        "VisionEncoder mismatch vs f32 reference"

    print("KERNEL_OK")
</pallas_src>

<mosaic_0001>
module attributes {stable_mosaic.version = 11 : i64} {
  func.func @_vision_encoder_kernel(%arg0: i32, %arg1: memref<16x48xf32, #tpu.memory_space<vmem>>, %arg2: memref<48x32xbf16, #tpu.memory_space<vmem>>, %arg3: memref<1x32xf32, #tpu.memory_space<vmem>>, %arg4: memref<1x32xf32, #tpu.memory_space<vmem>>, %arg5: memref<1x32xf32, #tpu.memory_space<vmem>>, %arg6: memref<16x32xf32, #tpu.memory_space<vmem>>) attributes {dimension_semantics = [#tpu.dimension_semantics<parallel>], iteration_bounds = array<i64: 1>, scalar_prefetch = 0 : i64, scratch_operands = 0 : i64, tpu.core_type = #tpu.core_type<tc>, window_params = [{transform_indices = @transform_0, window_bounds = array<i64: 16, 48>}, {pipeline_mode = #tpu.pipeline_mode<synchronous>, transform_indices = @transform_1, window_bounds = array<i64: 48, 32>}, {pipeline_mode = #tpu.pipeline_mode<synchronous>, transform_indices = @transform_2, window_bounds = array<i64: 1, 32>}, {pipeline_mode = #tpu.pipeline_mode<synchronous>, transform_indices = @transform_3, window_bounds = array<i64: 1, 32>}, {pipeline_mode = #tpu.pipeline_mode<synchronous>, transform_indices = @transform_4, window_bounds = array<i64: 1, 32>}, {transform_indices = @transform_5, window_bounds = array<i64: 16, 32>}]} {
    %c0 = arith.constant 0 : index
    %c0_0 = arith.constant 0 : index
    %0 = vector.load %arg1[%c0, %c0_0] : memref<16x48xf32, #tpu.memory_space<vmem>>, vector<16x48xf32>
    %1 = arith.truncf %0 : vector<16x48xf32> to vector<16x48xbf16>
    %c0_1 = arith.constant 0 : index
    %c0_2 = arith.constant 0 : index
    %2 = vector.load %arg2[%c0_1, %c0_2] : memref<48x32xbf16, #tpu.memory_space<vmem>>, vector<48x32xbf16>
    %cst = arith.constant dense<0.000000e+00> : vector<16x32xf32>
    %3 = tpu.matmul %1, %2, %cst {dimension_numbers = #tpu.dot_dimension_numbers<[1], [0], [0], [1], [0, 0, 1, 1], [], []>} : vector<16x48xbf16>, vector<48x32xbf16>, vector<16x32xf32> -> vector<16x32xf32>
    %c0_3 = arith.constant 0 : index
    %c0_4 = arith.constant 0 : index
    %4 = vector.load %arg3[%c0_3, %c0_4] : memref<1x32xf32, #tpu.memory_space<vmem>>, vector<1x32xf32>
    %5 = vector.broadcast %4 : vector<1x32xf32> to vector<16x32xf32>
    %6 = arith.addf %3, %5 : vector<16x32xf32>
    %cst_5 = arith.constant dense<0.000000e+00> : vector<16xf32>
    %7 = vector.multi_reduction <add>, %6, %cst_5 [1] : vector<16x32xf32> to vector<16xf32>
    %8 = vector.shape_cast %7 : vector<16xf32> to vector<16x1xf32>
    %cst_6 = arith.constant 3.200000e+01 : f32
    %9 = vector.broadcast %cst_6 : f32 to vector<16x1xf32>
    %10 = arith.divf %8, %9 : vector<16x1xf32>
    %11 = vector.broadcast %10 : vector<16x1xf32> to vector<16x32xf32>
    %12 = arith.subf %6, %11 : vector<16x32xf32>
    %13 = arith.mulf %12, %12 : vector<16x32xf32>
    %cst_7 = arith.constant dense<0.000000e+00> : vector<16xf32>
    %14 = vector.multi_reduction <add>, %13, %cst_7 [1] : vector<16x32xf32> to vector<16xf32>
    %15 = vector.shape_cast %14 : vector<16xf32> to vector<16x1xf32>
    %cst_8 = arith.constant 3.200000e+01 : f32
    %16 = vector.broadcast %cst_8 : f32 to vector<16x1xf32>
    %17 = arith.divf %15, %16 : vector<16x1xf32>
    %cst_9 = arith.constant 9.99999996E-13 : f32
    %18 = vector.broadcast %cst_9 : f32 to vector<16x1xf32>
    %19 = arith.addf %17, %18 : vector<16x1xf32>
    %20 = math.rsqrt %19 : vector<16x1xf32>
    %21 = vector.broadcast %20 : vector<16x1xf32> to vector<16x32xf32>
    %22 = arith.mulf %12, %21 : vector<16x32xf32>
    %c0_10 = arith.constant 0 : index
    %c0_11 = arith.constant 0 : index
    %23 = vector.load %arg4[%c0_10, %c0_11] : memref<1x32xf32, #tpu.memory_space<vmem>>, vector<1x32xf32>
    %24 = vector.broadcast %23 : vector<1x32xf32> to vector<16x32xf32>
    %25 = arith.mulf %22, %24 : vector<16x32xf32>
    %c0_12 = arith.constant 0 : index
    %c0_13 = arith.constant 0 : index
    %26 = vector.load %arg5[%c0_12, %c0_13] : memref<1x32xf32, #tpu.memory_space<vmem>>, vector<1x32xf32>
    %27 = vector.broadcast %26 : vector<1x32xf32> to vector<16x32xf32>
    %28 = arith.addf %25, %27 : vector<16x32xf32>
    %c0_14 = arith.constant 0 : index
    %c0_15 = arith.constant 0 : index
    %29 = vector.load %arg6[%c0_14, %c0_15] : memref<16x32xf32, #tpu.memory_space<vmem>>, vector<16x32xf32>
    tpu.vector_store %arg6[%c0_14, %c0_15], %28 {strides = array<i32>} : memref<16x32xf32, #tpu.memory_space<vmem>>, vector<16x32xf32>,
    return
  }
  func.func @transform_0(%arg0: i32) -> (i32, i32) {
    %c0_i32 = arith.constant 0 : i32
    %c0_i32_0 = arith.constant 0 : i32
    return %arg0, %c0_i32 : i32, i32
  }
  func.func @transform_1(%arg0: i32) -> (i32, i32) {
    %c0_i32 = arith.constant 0 : i32
    %c0_i32_0 = arith.constant 0 : i32
    %c0_i32_1 = arith.constant 0 : i32
    return %c0_i32, %c0_i32_0 : i32, i32
  }
  func.func @transform_2(%arg0: i32) -> (i32, i32) {
    %c0_i32 = arith.constant 0 : i32
    %c0_i32_0 = arith.constant 0 : i32
    %c0_i32_1 = arith.constant 0 : i32
    return %c0_i32, %c0_i32_0 : i32, i32
  }
  func.func @transform_3(%arg0: i32) -> (i32, i32) {
    %c0_i32 = arith.constant 0 : i32
    %c0_i32_0 = arith.constant 0 : i32
    %c0_i32_1 = arith.constant 0 : i32
    return %c0_i32, %c0_i32_0 : i32, i32
  }
  func.func @transform_4(%arg0: i32) -> (i32, i32) {
    %c0_i32 = arith.constant 0 : i32
    %c0_i32_0 = arith.constant 0 : i32
    %c0_i32_1 = arith.constant 0 : i32
    return %c0_i32, %c0_i32_0 : i32, i32
  }
  func.func @transform_5(%arg0: i32) -> (i32, i32) {
    %c0_i32 = arith.constant 0 : i32
    %c0_i32_0 = arith.constant 0 : i32
    return %arg0, %c0_i32 : i32, i32
  }
}

</mosaic_0001>

<llo_original>
// kernel: tpu_custom_call.1
$region0: #{tpu_custom_call.1}
  #allocation0 [shape = 'u32[]', space=smem, size = 0x4, offset = 0x4, fixed_abs, tag = 'smem constant byte address 0x4 - core index']
  #allocation1 [shape = 'u32[144,128]{1,0:T(1,128)}', space=vmem, size = 0x12000, scoped, tag = 'internal scratch']
  %s0 = inlined_call_operand.vmem [shape: f32[16,48], index: 0, kind: input, shape index: {}]
  %s1 = inlined_call_operand.vmem [shape: bf16[48,32], index: 1, kind: input, shape index: {}]
  %s2 = inlined_call_operand.vmem [shape: f32[1,32], index: 2, kind: input, shape index: {}]
  %s3 = inlined_call_operand.vmem [shape: f32[1,32], index: 3, kind: input, shape index: {}]
  %s4 = inlined_call_operand.vmem [shape: f32[1,32], index: 4, kind: input, shape index: {}]
  %s5 = inlined_call_operand.hbm [shape: f32[16,32], index: 5, kind: output, shape index: {}]
  %s6 = sld [smem:[#allocation0]]
  $region30: #{tpu_custom_call.1} parent=0
    _
  %s8 = ssub.s32 1, %s6
  %s9 = scalar_select 0, %s8, %s6
  $region1: #{tpu_custom_call.1} parent=0
    #allocation2 [shape = 'u8[8192]{0}', space=vmem, size = 0x2000, scoped, tag = 'output window, operand 0, single buffered']
    #allocation3 [shape = 's32[1]{0}', space=sflag, size = 0x4, scoped, tag = 'scoped memory for tpu_custom_call.1']
    %10 = vsyncpa [#allocation3], 0
    // Predicated region
    $region2: #{tpu_custom_call.1} parent=1 // pred_check
      _
    $region3: #{tpu_custom_call.1} parent=1 // pred_check_branch
      %12 = sbr.rel (0) target = $region5
    $region4: #{tpu_custom_call.1} parent=1 // pred_region
      _
    $region5: #{tpu_custom_call.1} parent=1 // pred_fallthru
      _
    // Predicated region
    $region6: #{tpu_custom_call.1} parent=1 // pred_check
      _
    $region7: #{tpu_custom_call.1} parent=1 // pred_check_branch
      %14 = sbr.rel (0) target = $region9
    $region8: #{tpu_custom_call.1} parent=1 // pred_region
      _
    $region9: #{tpu_custom_call.1} parent=1 // pred_fallthru
      _
    // Predicated region
    $region10: #{tpu_custom_call.1} parent=1 // pred_check
      _
    $region11: #{tpu_custom_call.1} parent=1 // pred_check_branch
      %16 = sbr.rel (0) target = $region13
    $region12: #{tpu_custom_call.1} parent=1 // pred_region
      _
    $region13: #{tpu_custom_call.1} parent=1 // pred_fallthru
      _
    // Predicated region
    $region14: #{tpu_custom_call.1} parent=1 // pred_check
      _
    $region15: #{tpu_custom_call.1} parent=1 // pred_check_branch
      %18 = sbr.rel (0) target = $region17
    $region16: #{tpu_custom_call.1} parent=1 // pred_region
      _
    $region17: #{tpu_custom_call.1} parent=1 // pred_fallthru
      _
    // Predicated region
    $region18: #{tpu_custom_call.1} parent=1 // pred_check
      _
    $region19: #{tpu_custom_call.1} parent=1 // pred_check_branch
      %20 = sbr.rel (0) target = $region21
    $region20: #{tpu_custom_call.1} parent=1 // pred_region
      _
    $region21: #{tpu_custom_call.1} parent=1 // pred_fallthru
      _
    %v22 = vld [vmem:[%s0] sm:$0xff]
    %v23 = vld [vmem:[%s0 + $0x8] sm:$0xff]
    %v24 = vpack.c.bf16 %v23, %v22
    %v25 = vld [vmem:[%s1] sm:$0xf]
    %v26 = vld [vmem:[%s1 + $0x4] sm:$0xf]
    %v27 = vld [vmem:[%s1 + $0x8] sm:$0xf]
    %v28 = vld [vmem:[%s1 + $0xc] sm:$0xf]
    %v29 = vld [vmem:[%s1 + $0x10] sm:$0xf]
    %v30 = vld [vmem:[%s1 + $0x14] sm:$0xf]
    %v31 = vld [vmem:[%s2] sm:$0x1]
    %v33 = vlaneseq
    %v34 = vshrl.u32 %v33, 7
    %v35 = vsub.s32 0, %v34
    %v36 = vrot.slane %v31, %v35
    %v44 = vunpack.c.l.b16 %v25
    %v45 = vunpack.c.l.b16 %v26
    %v46 = vunpack.c.l.b16 %v27
    %v47 = vunpack.c.l.b16 %v28
    %v48 = vunpack.c.l.b16 %v29
    %v49 = vunpack.c.l.b16 %v30
    %v50 = vpack.c.b16 %v45, %v44
    %v51 = vpack.c.b16 %v47, %v46
    %v52 = vpack.c.b16 %v49, %v48
    %vm56 = vcmask 392192
    %v58 = vsel %vm56, %v24, 0
    %60 = vmatprep.subr.bf16.mxu0 0
    %61 = vmatpush1.bf16.msra.mxu0 0
    %62 = vmatprep.subr.bf16.mxu0 0
    %63 = vmatpush1.bf16.msra.mxu0 0
    %64 = vmatprep.subr.bf16.mxu0 0
    %65 = vmatpush1.bf16.msra.mxu0 0
    %66 = vmatprep.subr.bf16.mxu0 0
    %67 = vmatpush1.bf16.msra.mxu0 0
    %68 = vmatprep.subr.bf16.mxu0 0
    %69 = vmatpush1.bf16.msra.mxu0 0
    %70 = vmatprep.subr.bf16.mxu0 0
    %71 = vmatpush1.bf16.msra.mxu0 %v52
    %72 = vmatprep.subr.bf16.mxu0 0
    %73 = vmatpush1.bf16.msra.mxu0 %v51
    %74 = vmatprep.subr.bf16.mxu0 0
    %75 = vmatpush1.bf16.msra.mxu0 %v50
    %76 = vmatprep.subr.bf16.mxu0 0
    %77 = vmatpush2.bf16.msra.mxu0 0
    %78 = vmatprep.subr.bf16.mxu0 0
    %79 = vmatpush2.bf16.msra.mxu0 0
    %80 = vmatprep.subr.bf16.mxu0 0
    %81 = vmatpush2.bf16.msra.mxu0 0
    %82 = vmatprep.subr.bf16.mxu0 0
    %83 = vmatpush2.bf16.msra.mxu0 0
    %84 = vmatprep.subr.bf16.mxu0 0
    %85 = vmatpush2.bf16.msra.mxu0 0
    %86 = vmatprep.subr.bf16.mxu0 0
    %87 = vmatpush2.bf16.msra.mxu0 0
    %88 = vmatprep.subr.bf16.mxu0 0
    %89 = vmatpush2.bf16.msra.mxu0 0
    %90 = vmatprep.subr.bf16.mxu0 0
    %91 = vmatpush2.bf16.msra.mxu0 0
    %92 = vmatprep.mubr.bf16.mxu0 0
    %93 = vmatmul.mubr.bf16.gmra.mxu0 %v58
    %v94 = vpop.f32.mrf.mxu0
    %v95 = vadd.f32 %v36, %v94
    %v96 = vpop.f32.mrf.mxu0
    %v97 = vpop.f32.mrf.mxu0
    %v98 = vadd.f32 %v36, %v97
    %v99 = vpop.f32.mrf.mxu0
    %100 = vdwg.mxu0
    %vm101 = vcmask 261120
    %v102 = vsel %vm101, %v95, 0.0
    %103 = vadd.xlane.f32.xlu0 %v102
    %v104 = vpop.xlane.xlu0 %103
    %v105 = vsel %vm101, %v98, 0.0
    %106 = vadd.xlane.f32.xlu0 %v105
    %v107 = vpop.xlane.xlu0 %106
    %v108 = vrcp.pop 32.0
    %v109 = vmul.f32 %v104, %v108
    %v110 = vmul.f32 %v107, %v108
    %v111 = vsub.f32 %v95, %v109
    %v112 = vsub.f32 %v98, %v110
    %v113 = vmul.f32 %v111, %v111
    %v114 = vmul.f32 %v112, %v112
    %v115 = vsel %vm101, %v113, 0.0
    %116 = vadd.xlane.f32.xlu0 %v115
    %v117 = vpop.xlane.xlu0 %116
    %v118 = vsel %vm101, %v114, 0.0
    %119 = vadd.xlane.f32.xlu0 %v118
    %v120 = vpop.xlane.xlu0 %119
    %v121 = vmul.f32 %v117, %v108
    %v122 = vmul.f32 %v120, %v108
    %v123 = vadd.f32 %v121, 1e-12
    %v124 = vadd.f32 %v122, 1e-12
    %v125 = vrsqrt.pop %v123
    %v126 = vrsqrt.pop %v124
    %v127 = vmul.f32 %v111, %v125
    %v128 = vmul.f32 %v112, %v126
    %v129 = vld [vmem:[%s3] sm:$0x1]
    %v131 = vlaneseq
    %v132 = vshrl.u32 %v131, 7
    %v133 = vsub.s32 0, %v132
    %v134 = vrot.slane %v129, %v133
    %v136 = vmul.f32 %v127, %v134
    %v137 = vmul.f32 %v128, %v134
    %v138 = vld [vmem:[%s4] sm:$0x1]
    %v140 = vlaneseq
    %v141 = vshrl.u32 %v140, 7
    %v142 = vsub.s32 0, %v141
    %v143 = vrot.slane %v138, %v142
    %v145 = vadd.f32 %v136, %v143
    %v146 = vadd.f32 %v137, %v143
    %147 = vst.msk [vmem:[#allocation2] sm:$0xff] %vm101, %v145
    %148 = vst.msk [vmem:[#allocation2 + $0x8] sm:$0xff] %vm101, %v146
    // Predicated region
    $region22: #{tpu_custom_call.1} parent=1 // pred_check
      _
    $region23: #{tpu_custom_call.1} parent=1 // pred_check_branch
      %150 = sbr.rel (0) target = $region25
    $region24: #{tpu_custom_call.1} parent=1 // pred_region
      %s152 = ssub.s32 256, 256
      %153 = vsyncadd [#allocation3], %s152
      %s154 = sshll.u32 [#allocation2], 4
      %s155 = int_to_ptr.vmem [resolvable:$true] %s154
      %160 = dma.vmem_to_hbm [thread:$0]  %s155, 256, %s5, [#allocation3], 128, 128, 8
    $region25: #{tpu_custom_call.1} parent=1 // pred_fallthru
      _
    // Predicated region
    $region26: #{tpu_custom_call.1} parent=1 // pred_check
      _
    $region27: #{tpu_custom_call.1} parent=1 // pred_check_branch
      %162 = sbr.rel (0) target = $region29
    $region28: #{tpu_custom_call.1} parent=1 // pred_region
      %163 = dma.done [#allocation3], 256
    $region29: #{tpu_custom_call.1} parent=1 // pred_fallthru
      _
    %164 = vsyncpa [#allocation3], 1

</llo_original>
